<compile_context>
chip_gen: v7x
topology: tpu7x:2x2x1
jax: 0.10.0
libtpu: 0.0.40
codegen_flags: <defaults>
</compile_context>

<pallas_src>
import functools

import jax
import jax.numpy as jnp
from jax.experimental import pallas as pl
from jax.experimental.pallas import tpu as pltpu


# --------------------------------------------------------------------------
# kernel
# --------------------------------------------------------------------------
def _make_kernel(n_rows, row_tile, lib_size, log_norm):
    """One (row_tile, G) tile: pred numerator, row validity, partial SSE."""
    has_tail = (n_rows % row_tile) != 0   # static at trace time

    def kernel(y_ref, recon_ref, mask_ref, gmask_ref,      # inputs
               pred_ref, rv_ref, sse_ref):                 # outputs
        y = y_ref[...].astype(jnp.float32)            # (TN, G)
        recon = recon_ref[...].astype(jnp.float32)    # (TN, G)
        mask = mask_ref[...].astype(jnp.float32)      # (TN, G)
        gmask = gmask_ref[...].astype(jnp.float32)    # (1, G), 0/1

        if has_tail:
            row_start = pl.program_id(0) * row_tile
            ridx = jax.lax.broadcasted_iota(jnp.int32, (row_tile, 1), 0)
            in_rows = (row_start + ridx) < n_rows     # (TN, 1) bool

        if lib_size is not None:
            row_sum = jnp.sum(y, axis=1, keepdims=True)            # (TN, 1)
            # No /0 guard: all-zero rows yield NaN/Inf, same as the PyTorch ref.
            y = y * (jnp.float32(lib_size) / row_sum)
        if log_norm:
            y = jnp.log(y + 1.0)

        size_factor = jnp.sum(y, axis=1, keepdims=True)            # (TN, 1)

        # pred numerator; the gene/row boolean gathers happen in the wrapper.
        pred = size_factor * recon * mask
        pred_ref[...] = pred.astype(pred_ref.dtype)

        # row validity = input_mask.sum(1) > 0 (pad rows forced to 0 so the
        # wrapper-side row filter also drops them).
        rv = jnp.sum(mask, axis=1, keepdims=True) > 0.0
        if has_tail:
            rv = jnp.logical_and(rv, in_rows)
        rv_ref[...] = rv.astype(jnp.float32)

        # Squared error.  gene_mask is applied once per tile on the (1, G)
        # lane partials (gmask**2 == gmask), not per element (VALU trim, v7x).
        diff = pred - y * mask
        sq = diff * diff
        if has_tail:
            sq = jnp.where(in_rows, sq, 0.0)          # kill NaN/Inf in pad rows
        lane_sums = jnp.sum(sq, axis=0, keepdims=True)             # (1, G)
        sse_tile = jnp.sum(lane_sums * gmask, keepdims=True)       # (1, 1)

        sub0 = jax.lax.broadcasted_iota(jnp.int32, (8, 1), 0) == 0
        sse_ref[...] = jnp.where(sub0, sse_tile, 0.0).astype(jnp.float32)

    return kernel


# --------------------------------------------------------------------------
# tiling / VMEM sizing helpers
# --------------------------------------------------------------------------
def _round_up(x, m):
    return ((x + m - 1) // m) * m


def _vmem_capacity_bytes():
    try:
        info = pltpu.get_tpu_info()
        cap = getattr(info, "vmem_capacity_bytes", None)
        if cap:
            return int(cap)
    except Exception:
        pass
    return 64 << 20   # conservative default (v7x per-TC VMEM)


def _choose_row_tile(n_rows, g, in_itemsizes):
    """Largest row tile (multiple of 32, <=512) that fits the VMEM budget.

    Dtype- and intermediate-aware: double-buffered input streams in their
    native widths, double-buffered f32 pred output, plus ~16 B/elem for the
    live f32 temporaries created inside the body.
    """
    vmem_cap = _vmem_capacity_bytes()
    budget = max(vmem_cap // 3, 4 << 20)
    bytes_per_row = 2 * (sum(in_itemsizes) + 4) * g + 16 * g + 16
    tile = budget // max(bytes_per_row, 1)
    tile = max(32, min(512, tile))        # >=512 rows already ~HBM roofline
    tile = (tile // 32) * 32
    tile = min(tile, _round_up(max(n_rows, 1), 32))
    return max(tile, 32), vmem_cap, bytes_per_row


# --------------------------------------------------------------------------
# pallas_call wrapper (jitted)
# --------------------------------------------------------------------------
@functools.partial(
    jax.jit,
    static_argnames=("lib_size", "log_norm", "row_tile", "vmem_limit_bytes"))
def _recon_loss_parts(y, recon, mask, gmask_row, *, lib_size, log_norm,
                      row_tile, vmem_limit_bytes):
    n, g = y.shape
    num_tiles = pl.cdiv(n, row_tile)
    n_pad = num_tiles * row_tile          # only OUTPUTS are padded (cheap)

    pred_num, rv, sse_part = pl.pallas_call(
        _make_kernel(n, row_tile, lib_size, log_norm),
        out_shape=(
            jax.ShapeDtypeStruct((n_pad, g), jnp.float32),       # pred numerator
            jax.ShapeDtypeStruct((n_pad, 1), jnp.float32),       # row_valid
            jax.ShapeDtypeStruct((num_tiles * 8, 1), jnp.float32),  # SSE partials
        ),
        grid_spec=pltpu.PrefetchScalarGridSpec(
            num_scalar_prefetch=0,
            grid=(num_tiles,),
            in_specs=[
                pl.BlockSpec((row_tile, g), lambda i: (i, 0)),   # y
                pl.BlockSpec((row_tile, g), lambda i: (i, 0)),   # recon
                pl.BlockSpec((row_tile, g), lambda i: (i, 0)),   # input_mask
                pl.BlockSpec((1, g), lambda i: (0, 0)),          # gene_mask
            ],
            out_specs=(
                pl.BlockSpec((row_tile, g), lambda i: (i, 0)),   # pred numerator
                pl.BlockSpec((row_tile, 1), lambda i: (i, 0)),   # row_valid
                pl.BlockSpec((8, 1), lambda i: (i, 0)),          # SSE partial
            ),
        ),
        compiler_params=pltpu.CompilerParams(
            # fully independent per-tile outputs -> megacore split on v7x
            dimension_semantics=("parallel",),
            vmem_limit_bytes=vmem_limit_bytes),
    )(y, recon, mask, gmask_row)

    sse = jnp.sum(sse_part)
    n_valid_rows = jnp.sum(rv)            # pad rows are written as 0
    return sse, n_valid_rows, pred_num, rv[:, 0]


# --------------------------------------------------------------------------
# public wrapper (matches ReconstructionLoss.forward semantics)
# --------------------------------------------------------------------------
def reconstruction_loss(out_dict, x_dict, *, lib_size=None, log_norm=False,
                        row_tile=None):
    """JAX/Pallas port of CellPLM ReconstructionLoss.forward."""
    y = jnp.asarray(x_dict["x_seq"])                   # (N, G) dense, native dtype
    recon = jnp.asarray(out_dict["recon"])             # (N, G)
    input_mask = jnp.asarray(x_dict["input_mask"])     # (N, G), native dtype
    gene_mask = jnp.asarray(x_dict["gene_mask"]) != 0  # (G,) bool

    n, g = y.shape
    gmask_row = gene_mask.astype(jnp.float32)[None, :]  # (1, G), tiny

    itemsizes = (jnp.dtype(y.dtype).itemsize,
                 jnp.dtype(recon.dtype).itemsize,
                 jnp.dtype(input_mask.dtype).itemsize)
    auto_tile, vmem_cap, bytes_per_row = _choose_row_tile(n, g, itemsizes)
    if row_tile is None:
        row_tile = auto_tile
    else:
        row_tile = max(32, _round_up(int(row_tile), 32))
        row_tile = min(row_tile, _round_up(max(n, 1), 32))

    needed = bytes_per_row * row_tile + 8 * 4 * g + (1 << 20)
    vmem_limit = int(min(vmem_cap * 9 // 10, max(32 << 20, 2 * needed)))

    sse, n_valid_rows, pred_num, rv = _recon_loss_parts(
        y, recon, input_mask, gmask_row,
        lib_size=lib_size, log_norm=log_norm,
        row_tile=row_tile, vmem_limit_bytes=vmem_limit)

    n_sel_genes = jnp.sum(gmask_row)
    loss = sse / (n_valid_rows * n_sel_genes)

    # out_dict['pred'] has a data-dependent shape (boolean gene / row selection)
    # so these two gathers stay in eager JAX; everything else was fused into the
    # kernel.  Pad rows carry rv == 0, so the row filter also drops them.
    pred_cols = pred_num[:, gene_mask]
    out_dict["pred"] = pred_cols[rv > 0]
    return loss


# --------------------------------------------------------------------------
# pure-jnp reference (replica of the PyTorch forward) for verification
# --------------------------------------------------------------------------
def _reference(out_dict, x_dict, lib_size, log_norm):
    y = jnp.asarray(x_dict["x_seq"], jnp.float32)
    if lib_size is not None:
        y = y / y.sum(1, keepdims=True) * lib_size
    if log_norm:
        y = jnp.log(y + 1.0)
    size_factor = y.sum(1, keepdims=True)
    mask = jnp.asarray(x_dict["input_mask"], jnp.float32)
    gene_mask = jnp.asarray(x_dict["gene_mask"])
    recon = jnp.asarray(out_dict["recon"], jnp.float32)
    pred = (size_factor * recon * mask)[:, gene_mask]
    truth = (y * mask)[:, gene_mask]
    rv = mask.sum(1) > 0
    pred, truth = pred[rv], truth[rv]
    return jnp.mean((pred - truth) ** 2), pred


# --------------------------------------------------------------------------
# demo / self-test
# --------------------------------------------------------------------------
if __name__ == "__main__":
    key = jax.random.PRNGKey(0)

    def make_case(k, n, g, zero_rows):
        k1, k2, k3, k4 = jax.random.split(k, 4)
        x_seq = jax.random.uniform(k1, (n, g), jnp.float32, 0.1, 5.0)
        recon = jax.random.uniform(k2, (n, g), jnp.float32, 0.0, 1.0)
        input_mask = (jax.random.uniform(k3, (n, g)) > 0.3).astype(jnp.float32)
        for r in zero_rows:
            input_mask = input_mask.at[r].set(0.0)       # fully-masked rows
        gene_mask = jax.random.uniform(k4, (g,)) > 0.25  # bool gene subset
        return ({"recon": recon},
                {"x_seq": x_seq, "input_mask": input_mask, "gene_mask": gene_mask})

    k_a, k_b = jax.random.split(key)

    # Case 1: N=16, G=64 -> single overhanging tile, lib_size + log_norm.
    out_d, x_d = make_case(k_a, 16, 64, (3, 10))
    loss = jax.block_until_ready(
        reconstruction_loss(out_d, x_d, lib_size=1.0e4, log_norm=True))
    ref_loss, ref_pred = _reference(out_d, x_d, 1.0e4, True)
    assert jnp.allclose(loss, ref_loss, rtol=1e-4, atol=1e-6), (loss, ref_loss)
    assert out_d["pred"].shape == ref_pred.shape
    assert jnp.allclose(out_d["pred"], ref_pred, rtol=1e-4, atol=1e-4)

    # Case 2: same data, default config (lib_size=None, log_norm=False).
    out_d2 = {"recon": out_d["recon"]}
    loss2 = jax.block_until_ready(reconstruction_loss(out_d2, x_d))
    ref_loss2, ref_pred2 = _reference(out_d2, x_d, None, False)
    assert jnp.allclose(loss2, ref_loss2, rtol=1e-4, atol=1e-6), (loss2, ref_loss2)
    assert jnp.allclose(out_d2["pred"], ref_pred2, rtol=1e-4, atol=1e-4)

    # Case 3: N=100, G=256, explicit row_tile=32 -> 4 tiles incl. ragged tail.
    out_d3, x_d3 = make_case(k_b, 100, 256, (0, 41, 95))
    loss3 = jax.block_until_ready(
        reconstruction_loss(out_d3, x_d3, lib_size=1.0e4, log_norm=True,
                            row_tile=32))
    ref_loss3, ref_pred3 = _reference(out_d3, x_d3, 1.0e4, True)
    assert jnp.allclose(loss3, ref_loss3, rtol=1e-4, atol=1e-6), (loss3, ref_loss3)
    assert out_d3["pred"].shape == ref_pred3.shape
    assert jnp.allclose(out_d3["pred"], ref_pred3, rtol=1e-4, atol=1e-4)

    # Case 4: same data, auto tile (single 128-row tile with 28-row tail).
    out_d4 = {"recon": out_d3["recon"]}
    loss4 = jax.block_until_ready(
        reconstruction_loss(out_d4, x_d3, lib_size=1.0e4, log_norm=True))
    assert jnp.allclose(loss4, ref_loss3, rtol=1e-4, atol=1e-6), (loss4, ref_loss3)

    print("KERNEL_OK")
</pallas_src>

<mosaic_0001>
module attributes {stable_mosaic.version = 11 : i64} {
  func.func @kernel(%arg0: i32, %arg1: memref<32x64xf32, #tpu.memory_space<vmem>>, %arg2: memref<32x64xf32, #tpu.memory_space<vmem>>, %arg3: memref<32x64xf32, #tpu.memory_space<vmem>>, %arg4: memref<1x64xf32, #tpu.memory_space<vmem>>, %arg5: memref<32x64xf32, #tpu.memory_space<vmem>>, %arg6: memref<32x1xf32, #tpu.memory_space<vmem>>, %arg7: memref<8x1xf32, #tpu.memory_space<vmem>>) attributes {dimension_semantics = [#tpu.dimension_semantics<parallel>], iteration_bounds = array<i64: 1>, scalar_prefetch = 0 : i64, scratch_operands = 0 : i64, tpu.core_type = #tpu.core_type<tc>, window_params = [{transform_indices = @transform_0, window_bounds = array<i64: 32, 64>}, {transform_indices = @transform_1, window_bounds = array<i64: 32, 64>}, {transform_indices = @transform_2, window_bounds = array<i64: 32, 64>}, {pipeline_mode = #tpu.pipeline_mode<synchronous>, transform_indices = @transform_3, window_bounds = array<i64: 1, 64>}, {transform_indices = @transform_4, window_bounds = array<i64: 32, 64>}, {transform_indices = @transform_5, window_bounds = array<i64: 32, 1>}, {transform_indices = @transform_6, window_bounds = array<i64: 8, 1>}]} {
    %c0 = arith.constant 0 : index
    %c0_0 = arith.constant 0 : index
    %0 = vector.load %arg1[%c0, %c0_0] : memref<32x64xf32, #tpu.memory_space<vmem>>, vector<32x64xf32>
    %c0_1 = arith.constant 0 : index
    %c0_2 = arith.constant 0 : index
    %1 = vector.load %arg2[%c0_1, %c0_2] : memref<32x64xf32, #tpu.memory_space<vmem>>, vector<32x64xf32>
    %c0_3 = arith.constant 0 : index
    %c0_4 = arith.constant 0 : index
    %2 = vector.load %arg3[%c0_3, %c0_4] : memref<32x64xf32, #tpu.memory_space<vmem>>, vector<32x64xf32>
    %c0_5 = arith.constant 0 : index
    %c0_6 = arith.constant 0 : index
    %3 = vector.load %arg4[%c0_5, %c0_6] : memref<1x64xf32, #tpu.memory_space<vmem>>, vector<1x64xf32>
    %c32_i32 = arith.constant 32 : i32
    %4 = arith.muli %arg0, %c32_i32 : i32
    %5 = tpu.iota {dimensions = array<i32: 0>} : vector<32x1xi32>
    %6 = vector.broadcast %4 : i32 to vector<32x1xi32>
    %7 = arith.addi %6, %5 : vector<32x1xi32>
    %c16_i32 = arith.constant 16 : i32
    %8 = vector.broadcast %c16_i32 : i32 to vector<32x1xi32>
    %9 = arith.cmpi slt, %7, %8 : vector<32x1xi32>
    %cst = arith.constant dense<0.000000e+00> : vector<32xf32>
    %10 = vector.multi_reduction <add>, %0, %cst [1] : vector<32x64xf32> to vector<32xf32>
    %11 = vector.shape_cast %10 : vector<32xf32> to vector<32x1xf32>
    %cst_7 = arith.constant 1.000000e+04 : f32
    %12 = vector.broadcast %cst_7 : f32 to vector<32x1xf32>
    %13 = arith.divf %12, %11 : vector<32x1xf32>
    %14 = vector.broadcast %13 : vector<32x1xf32> to vector<32x64xf32>
    %15 = arith.mulf %0, %14 : vector<32x64xf32>
    %cst_8 = arith.constant 1.000000e+00 : f32
    %16 = vector.broadcast %cst_8 : f32 to vector<32x64xf32>
    %17 = arith.addf %15, %16 : vector<32x64xf32>
    %18 = math.log %17 : vector<32x64xf32>
    %cst_9 = arith.constant dense<0.000000e+00> : vector<32xf32>
    %19 = vector.multi_reduction <add>, %18, %cst_9 [1] : vector<32x64xf32> to vector<32xf32>
    %20 = vector.shape_cast %19 : vector<32xf32> to vector<32x1xf32>
    %21 = vector.broadcast %20 : vector<32x1xf32> to vector<32x64xf32>
    %22 = arith.mulf %21, %1 : vector<32x64xf32>
    %23 = arith.mulf %22, %2 : vector<32x64xf32>
    %c0_10 = arith.constant 0 : index
    %c0_11 = arith.constant 0 : index
    %24 = vector.load %arg5[%c0_10, %c0_11] : memref<32x64xf32, #tpu.memory_space<vmem>>, vector<32x64xf32>
    tpu.vector_store %arg5[%c0_10, %c0_11], %23 {strides = array<i32>} : memref<32x64xf32, #tpu.memory_space<vmem>>, vector<32x64xf32>,
    %cst_12 = arith.constant dense<0.000000e+00> : vector<32xf32>
    %25 = vector.multi_reduction <add>, %2, %cst_12 [1] : vector<32x64xf32> to vector<32xf32>
    %26 = vector.shape_cast %25 : vector<32xf32> to vector<32x1xf32>
    %cst_13 = arith.constant 0.000000e+00 : f32
    %27 = vector.broadcast %cst_13 : f32 to vector<32x1xf32>
    %28 = arith.cmpf ogt, %26, %27 : vector<32x1xf32>
    %29 = arith.andi %28, %9 : vector<32x1xi1>
    %30 = arith.extui %29 : vector<32x1xi1> to vector<32x1xi32>
    %31 = arith.sitofp %30 : vector<32x1xi32> to vector<32x1xf32>
    %c0_14 = arith.constant 0 : index
    %c0_15 = arith.constant 0 : index
    %32 = vector.load %arg6[%c0_14, %c0_15] : memref<32x1xf32, #tpu.memory_space<vmem>>, vector<32x1xf32>
    tpu.vector_store %arg6[%c0_14, %c0_15], %31 {strides = array<i32>} : memref<32x1xf32, #tpu.memory_space<vmem>>, vector<32x1xf32>,
    %33 = arith.mulf %18, %2 : vector<32x64xf32>
    %34 = arith.subf %23, %33 : vector<32x64xf32>
    %35 = arith.mulf %34, %34 : vector<32x64xf32>
    %cst_16 = arith.constant 0.000000e+00 : f32
    %36 = vector.shape_cast %9 : vector<32x1xi1> to vector<32x1xi1>
    %37 = vector.broadcast %36 : vector<32x1xi1> to vector<32x64xi1>
    %38 = vector.broadcast %cst_16 : f32 to vector<32x64xf32>
    %39 = arith.select %37, %35, %38 : vector<32x64xi1>, vector<32x64xf32>
    %cst_17 = arith.constant dense<0.000000e+00> : vector<64xf32>
    %40 = vector.multi_reduction <add>, %39, %cst_17 [0] : vector<32x64xf32> to vector<64xf32>
    %41 = vector.shape_cast %40 : vector<64xf32> to vector<1x64xf32>
    %42 = arith.mulf %41, %3 : vector<1x64xf32>
    %43 = vector.shape_cast %42 : vector<1x64xf32> to vector<1x1x64xf32>
    %cst_18 = arith.constant dense<0.000000e+00> : vector<1xf32>
    %44 = vector.multi_reduction <add>, %43, %cst_18 [1, 2] : vector<1x1x64xf32> to vector<1xf32>
    %45 = vector.shape_cast %44 : vector<1xf32> to vector<1x1x1xf32>
    %46 = vector.extract %45[0, 0, 0] : f32 from vector<1x1x1xf32>
    %47 = vector.broadcast %46 : f32 to vector<1x1xf32>
    %48 = tpu.iota {dimensions = array<i32: 0>} : vector<8x1xi32>
    %c0_i32 = arith.constant 0 : i32
    %49 = vector.broadcast %c0_i32 : i32 to vector<8x1xi32>
    %50 = arith.cmpi eq, %48, %49 : vector<8x1xi32>
    %cst_19 = arith.constant 0.000000e+00 : f32
    %51 = vector.shape_cast %47 : vector<1x1xf32> to vector<1x1xf32>
    %52 = vector.broadcast %51 : vector<1x1xf32> to vector<8x1xf32>
    %53 = vector.broadcast %cst_19 : f32 to vector<8x1xf32>
    %54 = arith.select %50, %52, %53 : vector<8x1xi1>, vector<8x1xf32>
    %c0_20 = arith.constant 0 : index
    %c0_21 = arith.constant 0 : index
    %55 = vector.load %arg7[%c0_20, %c0_21] : memref<8x1xf32, #tpu.memory_space<vmem>>, vector<8x1xf32>
    tpu.vector_store %arg7[%c0_20, %c0_21], %54 {strides = array<i32>} : memref<8x1xf32, #tpu.memory_space<vmem>>, vector<8x1xf32>,
    return
  }
  func.func @transform_0(%arg0: i32) -> (i32, i32) {
    %c0_i32 = arith.constant 0 : i32
    %c0_i32_0 = arith.constant 0 : i32
    return %arg0, %c0_i32 : i32, i32
  }
  func.func @transform_1(%arg0: i32) -> (i32, i32) {
    %c0_i32 = arith.constant 0 : i32
    %c0_i32_0 = arith.constant 0 : i32
    return %arg0, %c0_i32 : i32, i32
  }
  func.func @transform_2(%arg0: i32) -> (i32, i32) {
    %c0_i32 = arith.constant 0 : i32
    %c0_i32_0 = arith.constant 0 : i32
    return %arg0, %c0_i32 : i32, i32
  }
  func.func @transform_3(%arg0: i32) -> (i32, i32) {
    %c0_i32 = arith.constant 0 : i32
    %c0_i32_0 = arith.constant 0 : i32
    %c0_i32_1 = arith.constant 0 : i32
    return %c0_i32, %c0_i32_0 : i32, i32
  }
  func.func @transform_4(%arg0: i32) -> (i32, i32) {
    %c0_i32 = arith.constant 0 : i32
    %c0_i32_0 = arith.constant 0 : i32
    return %arg0, %c0_i32 : i32, i32
  }
  func.func @transform_5(%arg0: i32) -> (i32, i32) {
    %c0_i32 = arith.constant 0 : i32
    %c0_i32_0 = arith.constant 0 : i32
    return %arg0, %c0_i32 : i32, i32
  }
  func.func @transform_6(%arg0: i32) -> (i32, i32) {
    %c0_i32 = arith.constant 0 : i32
    %c0_i32_0 = arith.constant 0 : i32
    return %arg0, %c0_i32 : i32, i32
  }
}

</mosaic_0001>

<llo_original>
// kernel: _recon_loss_parts.1
$region0: #{_recon_loss_parts.1}
  #allocation0 [shape = 'u32[]', space=smem, size = 0x4, offset = 0x4, fixed_abs, tag = 'smem constant byte address 0x4 - core index']
  #allocation1 [shape = 'u32[144,128]{1,0:T(1,128)}', space=vmem, size = 0x12000, scoped, tag = 'internal scratch']
  %s0 = inlined_call_operand.hbm [shape: f32[16,64], index: 0, kind: input, shape index: {}]
  %s1 = inlined_call_operand.hbm [shape: f32[16,64], index: 1, kind: input, shape index: {}]
  %s2 = inlined_call_operand.hbm [shape: f32[16,64], index: 2, kind: input, shape index: {}]
  %s3 = inlined_call_operand.vmem [shape: f32[1,64], index: 3, kind: input, shape index: {}]
  %s4 = inlined_call_operand.hbm [shape: f32[32,64], index: 4, kind: output, shape index: {0}]
  %s5 = inlined_call_operand.vmem [shape: f32[32,1], index: 5, kind: output, shape index: {1}]
  %s6 = inlined_call_operand.vmem [shape: f32[8,1], index: 6, kind: output, shape index: {2}]
  %7 = xla_tuple %s4, %s5, %s6
  %s8 = sld [smem:[#allocation0]]
  $region54: #{_recon_loss_parts.1} parent=0
    _
  %s10 = ssub.s32 1, %s8
  %s11 = scalar_select 0, %s10, %s8
  $region1: #{_recon_loss_parts.1} parent=0
    #allocation2 [shape = 'u8[16384]{0}', space=vmem, size = 0x4000, scoped, tag = 'input window, operand 0, single buffered']
    #allocation3 [shape = 's32[1]{0}', space=sflag, size = 0x4, scoped, tag = 'scoped memory for _recon_loss_parts.1']
    #allocation4 [shape = 's32[1]{0}', space=sflag, size = 0x4, scoped, tag = 'scoped memory for _recon_loss_parts.1']
    #allocation5 [shape = 'u8[16384]{0}', space=vmem, size = 0x4000, scoped, tag = 'input window, operand 1, single buffered']
    #allocation6 [shape = 's32[1]{0}', space=sflag, size = 0x4, scoped, tag = 'scoped memory for _recon_loss_parts.1']
    #allocation7 [shape = 'u8[16384]{0}', space=vmem, size = 0x4000, scoped, tag = 'input window, operand 2, single buffered']
    #allocation8 [shape = 'u8[16384]{0}', space=vmem, size = 0x4000, scoped, tag = 'output window, operand 0, single buffered']
    %12 = vsyncpa [#allocation3], 0
    %13 = vsyncpa [#allocation6], 0
    %14 = vsyncpa [#allocation4], 0
    // Predicated region
    $region2: #{_recon_loss_parts.1} parent=1 // pred_check
      _
    $region3: #{_recon_loss_parts.1} parent=1 // pred_check_branch
      %16 = sbr.rel (0) target = $region5
    $region4: #{_recon_loss_parts.1} parent=1 // pred_region
      %s18 = ssub.s32 512, 256
      %19 = vsyncadd [#allocation3], %s18
      %s20 = sshll.u32 [#allocation2], 4
      %s21 = int_to_ptr.vmem [resolvable:$true] %s20
      %26 = dma.hbm_to_vmem [thread:$0]  %s0, 256, %s21, [#allocation3], 128, 128, 8
    $region5: #{_recon_loss_parts.1} parent=1 // pred_fallthru
      _
    // Predicated region
    $region6: #{_recon_loss_parts.1} parent=1 // pred_check
      _
    $region7: #{_recon_loss_parts.1} parent=1 // pred_check_branch
      %28 = sbr.rel (0) target = $region9
    $region8: #{_recon_loss_parts.1} parent=1 // pred_region
      %s30 = ssub.s32 512, 256
      %31 = vsyncadd [#allocation6], %s30
      %s32 = sshll.u32 [#allocation5], 4
      %s33 = int_to_ptr.vmem [resolvable:$true] %s32
      %38 = dma.hbm_to_vmem [thread:$0]  %s1, 256, %s33, [#allocation6], 128, 128, 8
    $region9: #{_recon_loss_parts.1} parent=1 // pred_fallthru
      _
    // Predicated region
    $region10: #{_recon_loss_parts.1} parent=1 // pred_check
      _
    $region11: #{_recon_loss_parts.1} parent=1 // pred_check_branch
      %40 = sbr.rel (0) target = $region13
    $region12: #{_recon_loss_parts.1} parent=1 // pred_region
      %s42 = ssub.s32 512, 256
      %43 = vsyncadd [#allocation6], %s42
      %s44 = sshll.u32 [#allocation7], 4
      %s45 = int_to_ptr.vmem [resolvable:$true] %s44
      %50 = dma.hbm_to_vmem [thread:$0]  %s2, 256, %s45, [#allocation6], 128, 128, 8
    $region13: #{_recon_loss_parts.1} parent=1 // pred_fallthru
      _
    // Predicated region
    $region14: #{_recon_loss_parts.1} parent=1 // pred_check
      _
    $region15: #{_recon_loss_parts.1} parent=1 // pred_check_branch
      %52 = sbr.rel (0) target = $region17
    $region16: #{_recon_loss_parts.1} parent=1 // pred_region
      _
    $region17: #{_recon_loss_parts.1} parent=1 // pred_fallthru
      _
    // Predicated region
    $region18: #{_recon_loss_parts.1} parent=1 // pred_check
      _
    $region19: #{_recon_loss_parts.1} parent=1 // pred_check_branch
      %54 = sbr.rel (0) target = $region21
    $region20: #{_recon_loss_parts.1} parent=1 // pred_region
      %55 = dma.done [#allocation3], 512
    $region21: #{_recon_loss_parts.1} parent=1 // pred_fallthru
      _
    // Predicated region
    $region22: #{_recon_loss_parts.1} parent=1 // pred_check
      _
    $region23: #{_recon_loss_parts.1} parent=1 // pred_check_branch
      %57 = sbr.rel (0) target = $region25
    $region24: #{_recon_loss_parts.1} parent=1 // pred_region
      %58 = dma.done [#allocation6], 512
    $region25: #{_recon_loss_parts.1} parent=1 // pred_fallthru
      _
    // Predicated region
    $region26: #{_recon_loss_parts.1} parent=1 // pred_check
      _
    $region27: #{_recon_loss_parts.1} parent=1 // pred_check_branch
      %60 = sbr.rel (0) target = $region29
    $region28: #{_recon_loss_parts.1} parent=1 // pred_region
      %61 = dma.done [#allocation6], 512
    $region29: #{_recon_loss_parts.1} parent=1 // pred_fallthru
      _
    %v62 = vld [vmem:[#allocation2] sm:$0xff]
    %v63 = vld [vmem:[#allocation2 + $0x8] sm:$0xff]
    %v64 = vld [vmem:[#allocation2 + $0x10] sm:$0xff]
    %v65 = vld [vmem:[#allocation2 + $0x18] sm:$0xff]
    %v66 = vld [vmem:[#allocation5] sm:$0xff]
    %v67 = vld [vmem:[#allocation5 + $0x8] sm:$0xff]
    %v68 = vld [vmem:[#allocation5 + $0x10] sm:$0xff]
    %v69 = vld [vmem:[#allocation5 + $0x18] sm:$0xff]
    %v70 = vld [vmem:[#allocation7] sm:$0xff]
    %v71 = vld [vmem:[#allocation7 + $0x8] sm:$0xff]
    %v72 = vld [vmem:[#allocation7 + $0x10] sm:$0xff]
    %v73 = vld [vmem:[#allocation7 + $0x18] sm:$0xff]
    %v74 = vld [vmem:[%s3] sm:$0x1]
    %s75 = smul.u32 0, 32
    %v76 = vlaneseq
    %v77 = vshrl.u32 %v76, 7
    %v78 = vadd.s32 %v77, 8
    %v79 = vadd.s32 %v77, 16
    %v80 = vadd.s32 %v77, 24
    %v81 = vstv %s75
    %v82 = vadd.s32 %v81, %v77
    %v83 = vadd.s32 %v81, %v78
    %v84 = vadd.s32 %v81, %v79
    %v85 = vadd.s32 %v81, %v80
    %vm86 = vcmp.lt.s32.totalorder %v82, 16
    %vm87 = vcmp.lt.s32.totalorder %v83, 16
    %vm88 = vcmp.lt.s32.totalorder %v84, 16
    %vm89 = vcmp.lt.s32.totalorder %v85, 16
    %vm90 = vcmask 523264
    %v91 = vsel %vm90, %v62, 0.0
    %92 = vadd.xlane.f32.xlu0 %v91
    %v93 = vpop.xlane.xlu0 %92
    %v94 = vsel %vm90, %v63, 0.0
    %95 = vadd.xlane.f32.xlu0 %v94
    %v96 = vpop.xlane.xlu0 %95
    %v97 = vsel %vm90, %v64, 0.0
    %98 = vadd.xlane.f32.xlu0 %v97
    %v99 = vpop.xlane.xlu0 %98
    %v100 = vsel %vm90, %v65, 0.0
    %101 = vadd.xlane.f32.xlu0 %v100
    %v102 = vpop.xlane.xlu0 %101
    %v103 = vrcp.pop %v93
    %v104 = vmul.f32 10000.0, %v103
    %v105 = vrcp.pop %v96
    %v106 = vmul.f32 10000.0, %v105
    %v107 = vrcp.pop %v99
    %v108 = vmul.f32 10000.0, %v107
    %v109 = vrcp.pop %v102
    %v110 = vmul.f32 10000.0, %v109
    %v111 = vmul.f32 %v62, %v104
    %v112 = vmul.f32 %v63, %v106
    %v113 = vmul.f32 %v64, %v108
    %v114 = vmul.f32 %v65, %v110
    %v115 = vadd.f32 %v111, 1.0
    %v116 = vadd.f32 %v112, 1.0
    %v117 = vadd.f32 %v113, 1.0
    %v118 = vadd.f32 %v114, 1.0
    %v119 = vlog2.pop %v115
    %v120 = vmul.f32 %v119, 0.6931472
    %v121 = vlog2.pop %v116
    %v122 = vmul.f32 %v121, 0.6931472
    %v123 = vlog2.pop %v117
    %v124 = vmul.f32 %v123, 0.6931472
    %v125 = vlog2.pop %v118
    %v126 = vmul.f32 %v125, 0.6931472
    %v127 = vsel %vm90, %v120, 0.0
    %128 = vadd.xlane.f32.xlu0 %v127
    %v129 = vpop.xlane.xlu0 %128
    %v130 = vsel %vm90, %v122, 0.0
    %131 = vadd.xlane.f32.xlu0 %v130
    %v132 = vpop.xlane.xlu0 %131
    %v133 = vsel %vm90, %v124, 0.0
    %134 = vadd.xlane.f32.xlu0 %v133
    %v135 = vpop.xlane.xlu0 %134
    %v136 = vsel %vm90, %v126, 0.0
    %137 = vadd.xlane.f32.xlu0 %v136
    %v138 = vpop.xlane.xlu0 %137
    %v139 = vmul.f32 %v129, %v66
    %v140 = vmul.f32 %v132, %v67
    %v141 = vmul.f32 %v135, %v68
    %v142 = vmul.f32 %v138, %v69
    %v143 = vmul.f32 %v139, %v70
    %v144 = vmul.f32 %v140, %v71
    %v145 = vmul.f32 %v141, %v72
    %v146 = vmul.f32 %v142, %v73
    %147 = vst.msk [vmem:[#allocation8] sm:$0xff] %vm90, %v143
    %148 = vst.msk [vmem:[#allocation8 + $0x8] sm:$0xff] %vm90, %v144
    %149 = vst.msk [vmem:[#allocation8 + $0x10] sm:$0xff] %vm90, %v145
    %150 = vst.msk [vmem:[#allocation8 + $0x18] sm:$0xff] %vm90, %v146
    %v151 = vsel %vm90, %v70, 0.0
    %152 = vadd.xlane.f32.xlu0 %v151
    %v153 = vpop.xlane.xlu0 %152
    %v154 = vsel %vm90, %v71, 0.0
    %155 = vadd.xlane.f32.xlu0 %v154
    %v156 = vpop.xlane.xlu0 %155
    %v157 = vsel %vm90, %v72, 0.0
    %158 = vadd.xlane.f32.xlu0 %v157
    %v159 = vpop.xlane.xlu0 %158
    %v160 = vsel %vm90, %v73, 0.0
    %161 = vadd.xlane.f32.xlu0 %v160
    %v162 = vpop.xlane.xlu0 %161
    %vm163 = vcmp.gt.f32.partialorder %v153, 0.0
    %vm164 = vcmp.gt.f32.partialorder %v156, 0.0
    %vm165 = vcmp.gt.f32.partialorder %v159, 0.0
    %vm166 = vcmp.gt.f32.partialorder %v162, 0.0
    %vm167 = vmand %vm163, %vm86
    %vm168 = vmand %vm164, %vm87
    %vm169 = vmand %vm165, %vm88
    %vm170 = vmand %vm166, %vm89
    %v171 = vsel %vm167, 1, 0
    %v172 = vsel %vm168, 1, 0
    %v173 = vsel %vm169, 1, 0
    %v174 = vsel %vm170, 1, 0
    %v175 = vcvt.s32.f32 %v171
    %v176 = vcvt.s32.f32 %v172
    %v177 = vcvt.s32.f32 %v173
    %v178 = vcvt.s32.f32 %v174
    %vm179 = vcmask 7168
    %180 = vst.msk [vmem:[%s5] sm:$0xff] %vm179, %v175
    %181 = vst.msk [vmem:[%s5 + $0x8] sm:$0xff] %vm179, %v176
    %182 = vst.msk [vmem:[%s5 + $0x10] sm:$0xff] %vm179, %v177
    %183 = vst.msk [vmem:[%s5 + $0x18] sm:$0xff] %vm179, %v178
    %v184 = vmul.f32 %v120, %v70
    %v185 = vmul.f32 %v122, %v71
    %v186 = vmul.f32 %v124, %v72
    %v187 = vmul.f32 %v126, %v73
    %v188 = vsub.f32 %v143, %v184
    %v189 = vsub.f32 %v144, %v185
    %v190 = vsub.f32 %v145, %v186
    %v191 = vsub.f32 %v146, %v187
    %v192 = vmul.f32 %v188, %v188
    %v193 = vmul.f32 %v189, %v189
    %v194 = vmul.f32 %v190, %v190
    %v195 = vmul.f32 %v191, %v191
    %v196 = vsel %vm86, 1, 0
    %v197 = vsel %vm87, 1, 0
    %v198 = vsel %vm88, 1, 0
    %v199 = vsel %vm89, 1, 0
    %vm200 = vcmp.eq.s32.totalorder %v196, 1
    %vm201 = vcmp.eq.s32.totalorder %v197, 1
    %vm202 = vcmp.eq.s32.totalorder %v198, 1
    %vm203 = vcmp.eq.s32.totalorder %v199, 1
    %v204 = vsel %vm200, %v192, 0.0
    %v205 = vsel %vm201, %v193, 0.0
    %v206 = vsel %vm202, %v194, 0.0
    %v207 = vsel %vm203, %v195, 0.0
    %v208 = vsel %vm90, %v204, 0.0
    %v209 = vsel %vm90, %v205, 0.0
    %v210 = vadd.f32 %v208, %v209
    %v211 = vsel %vm90, %v206, 0.0
    %v212 = vadd.f32 %v210, %v211
    %v213 = vsel %vm90, %v207, 0.0
    %v214 = vadd.f32 %v212, %v213
    %v215 = vrot.slane %v214, 4
    %v216 = vadd.f32 %v214, %v215
    %v217 = vrot.slane %v216, 2
    %v218 = vadd.f32 %v216, %v217
    %v219 = vrot.slane %v218, 1
    %v220 = vadd.f32 %v218, %v219
    %v221 = vmul.f32 %v220, %v74
    %vm222 = vcmask 516096
    %v223 = vsel %vm222, %v221, 0.0
    %224 = vadd.xlane.f32.xlu0 %v223
    %v225 = vpop.xlane.xlu0 %224
    %v226 = vrot.slane %v225, 4
    %v227 = vadd.f32 %v225, %v226
    %v228 = vrot.slane %v227, 2
    %v229 = vadd.f32 %v227, %v228
    %v230 = vrot.slane %v229, 1
    %v231 = vadd.f32 %v229, %v230
    %s232 = vtos %v231
    %vm233 = vcmp.eq.s32.totalorder %v77, 0
    %v234 = vstv %s232
    %v235 = vsel %vm233, %v234, 0.0
    %236 = vst.msk [vmem:[%s6] sm:$0xff] %vm179, %v235
    // Predicated region
    $region30: #{_recon_loss_parts.1} parent=1 // pred_check
      _
    $region31: #{_recon_loss_parts.1} parent=1 // pred_check_branch
      %238 = sbr.rel (0) target = $region33
    $region32: #{_recon_loss_parts.1} parent=1 // pred_region
      %s240 = ssub.s32 512, 512
      %241 = vsyncadd [#allocation4], %s240
      %s242 = sshll.u32 [#allocation8], 4
      %s243 = int_to_ptr.vmem [resolvable:$true] %s242
      %248 = dma.vmem_to_hbm [thread:$0]  %s243, 512, %s4, [#allocation4], 128, 128, 8
    $region33: #{_recon_loss_parts.1} parent=1 // pred_fallthru
      _
    // Predicated region
    $region34: #{_recon_loss_parts.1} parent=1 // pred_check
      _
    $region35: #{_recon_loss_parts.1} parent=1 // pred_check_branch
      %250 = sbr.rel (0) target = $region37
    $region36: #{_recon_loss_parts.1} parent=1 // pred_region
      _
    $region37: #{_recon_loss_parts.1} parent=1 // pred_fallthru
      _
    // Predicated region
    $region38: #{_recon_loss_parts.1} parent=1 // pred_check
      _
    $region39: #{_recon_loss_parts.1} parent=1 // pred_check_branch
      %252 = sbr.rel (0) target = $region41
    $region40: #{_recon_loss_parts.1} parent=1 // pred_region
      _
    $region41: #{_recon_loss_parts.1} parent=1 // pred_fallthru
      _
    // Predicated region
    $region42: #{_recon_loss_parts.1} parent=1 // pred_check
      _
    $region43: #{_recon_loss_parts.1} parent=1 // pred_check_branch
      %254 = sbr.rel (0) target = $region45
    $region44: #{_recon_loss_parts.1} parent=1 // pred_region
      %255 = dma.done [#allocation4], 512
    $region45: #{_recon_loss_parts.1} parent=1 // pred_fallthru
      _
    // Predicated region
    $region46: #{_recon_loss_parts.1} parent=1 // pred_check
      _
    $region47: #{_recon_loss_parts.1} parent=1 // pred_check_branch
      %257 = sbr.rel (0) target = $region49
    $region48: #{_recon_loss_parts.1} parent=1 // pred_region
      _
    $region49: #{_recon_loss_parts.1} parent=1 // pred_fallthru
      _
    // Predicated region
    $region50: #{_recon_loss_parts.1} parent=1 // pred_check
      _
    $region51: #{_recon_loss_parts.1} parent=1 // pred_check_branch
      %259 = sbr.rel (0) target = $region53
    $region52: #{_recon_loss_parts.1} parent=1 // pred_region
      _
    $region53: #{_recon_loss_parts.1} parent=1 // pred_fallthru
      _
    %260 = vsyncpa [#allocation3], 1
    %261 = vsyncpa [#allocation6], 1
    %262 = vsyncpa [#allocation4], 1

</llo_original>
